<compile_context>
chip_gen: v5e
topology: v5e:2x2
jax: 0.10.0
libtpu: 0.0.40
codegen_flags: <defaults>
</compile_context>

<pallas_src>
import functools

import jax
import jax.numpy as jnp
from jax import lax
from jax.experimental import pallas as pl
from jax.experimental.pallas import tpu as pltpu


def _mm_t(a, b):
    """a @ b.T, contracting the last dim of both operands, f32 accumulation (MXU)."""
    return lax.dot_general(
        a, b, (((1,), (1,)), ((), ())), preferred_element_type=jnp.float32
    )


def _mhca_kernel(x_ref, xa_ref, wq_ref, bq_ref, wk_ref, wv_ref, bv_ref,
                 wo_ref, bo_ref, o_ref, *kv_scratch, n_head, d_head):
    cdtype = x_ref.dtype                     # native compute dtype for all MXU feeds
    D = n_head * d_head
    S = xa_ref.shape[0]
    tT = x_ref.shape[0]

    # ---- K / V projections: k = xa @ Wk^T, v = xa @ Wv^T + bv, kept transposed (D, S).
    def _kv_from_xa():
        xa = xa_ref[...]                                         # (S, D)
        kT = _mm_t(wk_ref[...], xa)                              # (D, S) f32 acc
        vT = _mm_t(wv_ref[...], xa) + bv_ref[...]                # (D, S) f32 acc
        return kT.astype(cdtype), vT.astype(cdtype)

    if kv_scratch:
        # T is tiled: compute K/V once per batch element (t == 0), cache across T tiles.
        kT_scr, vT_scr = kv_scratch

        @pl.when(pl.program_id(1) == 0)
        def _():
            kT_new, vT_new = _kv_from_xa()
            kT_scr[...] = kT_new
            vT_scr[...] = vT_new

        kT, vT = kT_scr[...], vT_scr[...]
    else:
        # Single T tile: use K/V directly, no scratch round trip.
        kT, vT = _kv_from_xa()

    k_h = kT.reshape(n_head, d_head, S)      # free leading-dim split (d_head % 8 == 0)
    v_h = vT.reshape(n_head, d_head, S)

    # ---- Q projection (d_head**-0.5 already folded into wq/bq in prepare_mhca_params).
    x = x_ref[...]                                               # (tT, D)
    qT = _mm_t(wq_ref[...], x) + bq_ref[...]                     # (D, tT) f32 acc
    q_h = jnp.swapaxes(qT.astype(cdtype).reshape(n_head, d_head, tT), 1, 2)  # (nh, tT, dh)

    # ---- Scores: head-batched einsum('htd,hds->hts') -> (nh, tT, S), f32.
    s = lax.dot_general(q_h, k_h, (((2,), (1,)), ((0,), (0,))),
                        preferred_element_type=jnp.float32)
    s = s - jnp.max(s, axis=-1, keepdims=True)
    e = jnp.exp(s)
    inv_l = pl.reciprocal(jnp.sum(e, axis=-1, keepdims=True), approx=False)
    p = (e * inv_l).astype(cdtype)                               # (nh, tT, S)

    # ---- PV: einsum('hds,hts->hdt') -> (nh, dh, tT); transposed so the head merge back
    #      to (D, tT) is a free leading-dim reshape (then one 2-D transpose to (tT, D)).
    attT = lax.dot_general(v_h, p, (((2,), (2,)), ((0,), (0,))),
                           preferred_element_type=jnp.float32)
    att = attT.reshape(D, tT).astype(cdtype).T                   # (tT, D)

    # ---- Output projection: lane-dense (tT, D) result, single dense store.
    out = _mm_t(att, wo_ref[...]) + bo_ref[...]                  # (tT, D) f32 acc
    o_ref[...] = out.astype(o_ref.dtype)


def prepare_mhca_params(params, n_head):
    """One-time parameter prep: fold the d_head**-0.5 score scaling into Wq/bq and
    reshape biases to broadcast-ready column/row vectors."""
    D = params["wq"].shape[0]
    d_head = D // n_head
    scale2 = jnp.asarray(d_head ** -0.5, dtype=params["wq"].dtype)
    return dict(
        wq=params["wq"] * scale2,
        bq=(params["bq"] * scale2).reshape(D, 1),
        wk=params["wk"],
        wv=params["wv"],
        bv=params["bv"].reshape(D, 1),
        wo=params["wo"],
        bo=params["bo"].reshape(1, D),
    )


def mhca_pallas(x, xa, prepped, *, n_head):
    """Cross-attention forward: x (N, T, D) attends over xa (N, S, D)."""
    N, T, D = x.shape
    S = xa.shape[1]
    assert D % n_head == 0
    d_head = D // n_head
    assert d_head % 8 == 0, "head-split layout assumes d_head is a multiple of 8"

    # Query-tile size: full T when small, else a 128/256 tile (keeps (8,128) legality).
    if T % 256 == 0:
        tT = 256
    elif T % 128 == 0:
        tT = 128
    else:
        tT = T
    nT = T // tT
    use_kv_cache = nT > 1

    kernel = functools.partial(_mhca_kernel, n_head=n_head, d_head=d_head)
    rep = lambda b, t: (0, 0)   # weights / biases: same (only) block at every grid step

    # VMEM budget: weights (double-buffered) + x/xa/out blocks + K/V cache + f32 temps.
    itemsize = x.dtype.itemsize
    est = ((8 * D * D + 6 * (tT + S) * D) * itemsize
           + (2 * D * S * itemsize if use_kv_cache else 0)
           + (6 * n_head * tT * S + 10 * tT * D) * 4)
    vmem_limit = int(min(64 * 2 ** 20, max(32 * 2 ** 20, 2 * est)))

    scratch_shapes = (
        [pltpu.VMEM((D, S), x.dtype), pltpu.VMEM((D, S), x.dtype)]
        if use_kv_cache else []
    )

    grid_spec = pltpu.PrefetchScalarGridSpec(
        num_scalar_prefetch=0,
        grid=(N, nT),
        in_specs=[
            pl.BlockSpec((None, tT, D), lambda b, t: (b, t, 0)),   # x   (query tile)
            pl.BlockSpec((None, S, D), lambda b, t: (b, 0, 0)),    # xa  (full context)
            pl.BlockSpec((D, D), rep),                             # Wq (scale folded)
            pl.BlockSpec((D, 1), rep),                             # bq (column)
            pl.BlockSpec((D, D), rep),                             # Wk
            pl.BlockSpec((D, D), rep),                             # Wv
            pl.BlockSpec((D, 1), rep),                             # bv (column)
            pl.BlockSpec((D, D), rep),                             # Wo
            pl.BlockSpec((1, D), rep),                             # bo (row)
        ],
        out_specs=pl.BlockSpec((None, tT, D), lambda b, t: (b, t, 0)),
        scratch_shapes=scratch_shapes,
    )

    return pl.pallas_call(
        kernel,
        out_shape=jax.ShapeDtypeStruct((N, T, D), x.dtype),
        grid_spec=grid_spec,
        compiler_params=pltpu.CompilerParams(
            # batch axis parallel (megacore); T axis must stay sequential per batch so
            # the t == 0 K/V-cache fill is seen by the later T tiles of the same batch.
            dimension_semantics=("parallel", "arbitrary"),
            vmem_limit_bytes=vmem_limit,
        ),
    )(x, xa, prepped["wq"], prepped["bq"], prepped["wk"], prepped["wv"],
      prepped["bv"], prepped["wo"], prepped["bo"])


def mhca_reference(x, xa, p, n_head):
    """Pure-JAX reference mirroring the PyTorch module (HIGHEST precision dots)."""
    hp = lax.Precision.HIGHEST
    D = x.shape[-1]
    dh = D // n_head
    scale = dh ** (-0.25)
    q = jnp.einsum("ntd,ed->nte", x, p["wq"], precision=hp) + p["bq"]
    k = jnp.einsum("nsd,ed->nse", xa, p["wk"], precision=hp)
    v = jnp.einsum("nsd,ed->nse", xa, p["wv"], precision=hp) + p["bv"]
    N, T, _ = q.shape
    S = k.shape[1]
    qh = q.reshape(N, T, n_head, dh) * scale
    kh = k.reshape(N, S, n_head, dh) * scale
    vh = v.reshape(N, S, n_head, dh)
    s = jnp.einsum("nthd,nshd->nhts", qh, kh, precision=hp)
    w = jax.nn.softmax(s, axis=-1)
    o = jnp.einsum("nhts,nshd->nthd", w, vh, precision=hp).reshape(N, T, D)
    return jnp.einsum("ntd,ed->nte", o, p["wo"], precision=hp) + p["bo"]


if __name__ == "__main__":
    def run_case(key, n_head, n_state, N, T, S, atol, rtol):
        keys = jax.random.split(key, 9)
        x = jax.random.normal(keys[0], (N, T, n_state), dtype=jnp.float32)
        xa = jax.random.normal(keys[1], (N, S, n_state), dtype=jnp.float32)
        params = dict(
            wq=jax.random.normal(keys[2], (n_state, n_state), dtype=jnp.float32),
            bq=jax.random.normal(keys[3], (n_state,), dtype=jnp.float32),
            wk=jax.random.normal(keys[4], (n_state, n_state), dtype=jnp.float32),
            wv=jax.random.normal(keys[5], (n_state, n_state), dtype=jnp.float32),
            bv=jax.random.normal(keys[6], (n_state,), dtype=jnp.float32),
            wo=jax.random.normal(keys[7], (n_state, n_state), dtype=jnp.float32),
            bo=jax.random.normal(keys[8], (n_state,), dtype=jnp.float32),
        )
        prepped = prepare_mhca_params(params, n_head)
        y = mhca_pallas(x, xa, prepped, n_head=n_head)
        jax.block_until_ready(y)
        y_ref = mhca_reference(x, xa, params, n_head)
        assert y.shape == (N, T, n_state) and y.dtype == x.dtype
        max_err = float(jnp.max(jnp.abs(y - y_ref)))
        assert jnp.allclose(y, y_ref, atol=atol, rtol=rtol), (
            f"mismatch vs reference, max abs err {max_err}"
        )

    k_small, k_tiled = jax.random.split(jax.random.PRNGKey(0))
    # Small shapes implied by the module (single query tile; no K/V scratch path).
    run_case(k_small, n_head=4, n_state=32, N=2, T=8, S=16, atol=2e-3, rtol=2e-3)
    # Query-tiled path: grid = (N, T // 128), exercises the cached-K/V scratch branch.
    run_case(k_tiled, n_head=4, n_state=32, N=2, T=384, S=64, atol=2e-3, rtol=2e-3)
    print("KERNEL_OK")
</pallas_src>

<mosaic_0001>
module attributes {stable_mosaic.version = 11 : i64} {
  func.func @_mhca_kernel(%arg0: i32, %arg1: i32, %arg2: memref<1x8x32xf32, #tpu.memory_space<vmem>>, %arg3: memref<1x16x32xf32, #tpu.memory_space<vmem>>, %arg4: memref<32x32xf32, #tpu.memory_space<vmem>>, %arg5: memref<32x1xf32, #tpu.memory_space<vmem>>, %arg6: memref<32x32xf32, #tpu.memory_space<vmem>>, %arg7: memref<32x32xf32, #tpu.memory_space<vmem>>, %arg8: memref<32x1xf32, #tpu.memory_space<vmem>>, %arg9: memref<32x32xf32, #tpu.memory_space<vmem>>, %arg10: memref<1x32xf32, #tpu.memory_space<vmem>>, %arg11: memref<1x8x32xf32, #tpu.memory_space<vmem>>) attributes {dimension_semantics = [#tpu.dimension_semantics<parallel>, #tpu.dimension_semantics<arbitrary>], iteration_bounds = array<i64: 2, 1>, scalar_prefetch = 0 : i64, scratch_operands = 0 : i64, tpu.core_type = #tpu.core_type<tc>, window_params = [{transform_indices = @transform_0, window_bounds = array<i64: 1, 8, 32>}, {transform_indices = @transform_1, window_bounds = array<i64: 1, 16, 32>}, {pipeline_mode = #tpu.pipeline_mode<synchronous>, transform_indices = @transform_2, window_bounds = array<i64: 32, 32>}, {pipeline_mode = #tpu.pipeline_mode<synchronous>, transform_indices = @transform_3, window_bounds = array<i64: 32, 1>}, {pipeline_mode = #tpu.pipeline_mode<synchronous>, transform_indices = @transform_4, window_bounds = array<i64: 32, 32>}, {pipeline_mode = #tpu.pipeline_mode<synchronous>, transform_indices = @transform_5, window_bounds = array<i64: 32, 32>}, {pipeline_mode = #tpu.pipeline_mode<synchronous>, transform_indices = @transform_6, window_bounds = array<i64: 32, 1>}, {pipeline_mode = #tpu.pipeline_mode<synchronous>, transform_indices = @transform_7, window_bounds = array<i64: 32, 32>}, {pipeline_mode = #tpu.pipeline_mode<synchronous>, transform_indices = @transform_8, window_bounds = array<i64: 1, 32>}, {transform_indices = @transform_9, window_bounds = array<i64: 1, 8, 32>}]} {
    %c0 = arith.constant 0 : index
    %c0_0 = arith.constant 0 : index
    %c0_1 = arith.constant 0 : index
    %0 = vector.load %arg3[%c0, %c0_0, %c0_1] : memref<1x16x32xf32, #tpu.memory_space<vmem>>, vector<1x16x32xf32>
    %1 = vector.shape_cast %0 : vector<1x16x32xf32> to vector<16x32xf32>
    %c0_2 = arith.constant 0 : index
    %c0_3 = arith.constant 0 : index
    %2 = vector.load %arg6[%c0_2, %c0_3] : memref<32x32xf32, #tpu.memory_space<vmem>>, vector<32x32xf32>
    %cst = arith.constant dense<0.000000e+00> : vector<32x16xf32>
    %3 = tpu.matmul %2, %1, %cst {dimension_numbers = #tpu.dot_dimension_numbers<[1], [1], [0], [0], [0, 0, 1, 0], [], []>} : vector<32x32xf32>, vector<16x32xf32>, vector<32x16xf32> -> vector<32x16xf32>
    %c0_4 = arith.constant 0 : index
    %c0_5 = arith.constant 0 : index
    %4 = vector.load %arg7[%c0_4, %c0_5] : memref<32x32xf32, #tpu.memory_space<vmem>>, vector<32x32xf32>
    %cst_6 = arith.constant dense<0.000000e+00> : vector<32x16xf32>
    %5 = tpu.matmul %4, %1, %cst_6 {dimension_numbers = #tpu.dot_dimension_numbers<[1], [1], [0], [0], [0, 0, 1, 0], [], []>} : vector<32x32xf32>, vector<16x32xf32>, vector<32x16xf32> -> vector<32x16xf32>
    %c0_7 = arith.constant 0 : index
    %c0_8 = arith.constant 0 : index
    %6 = vector.load %arg8[%c0_7, %c0_8] : memref<32x1xf32, #tpu.memory_space<vmem>>, vector<32x1xf32>
    %7 = vector.broadcast %6 : vector<32x1xf32> to vector<32x16xf32>
    %8 = arith.addf %5, %7 : vector<32x16xf32>
    %9 = vector.shape_cast %3 : vector<32x16xf32> to vector<4x8x16xf32>
    %10 = vector.shape_cast %8 : vector<32x16xf32> to vector<4x8x16xf32>
    %c0_9 = arith.constant 0 : index
    %c0_10 = arith.constant 0 : index
    %c0_11 = arith.constant 0 : index
    %11 = vector.load %arg2[%c0_9, %c0_10, %c0_11] : memref<1x8x32xf32, #tpu.memory_space<vmem>>, vector<1x8x32xf32>
    %12 = vector.shape_cast %11 : vector<1x8x32xf32> to vector<8x32xf32>
    %c0_12 = arith.constant 0 : index
    %c0_13 = arith.constant 0 : index
    %13 = vector.load %arg4[%c0_12, %c0_13] : memref<32x32xf32, #tpu.memory_space<vmem>>, vector<32x32xf32>
    %cst_14 = arith.constant dense<0.000000e+00> : vector<32x8xf32>
    %14 = tpu.matmul %13, %12, %cst_14 {dimension_numbers = #tpu.dot_dimension_numbers<[1], [1], [0], [0], [0, 0, 1, 0], [], []>} : vector<32x32xf32>, vector<8x32xf32>, vector<32x8xf32> -> vector<32x8xf32>
    %c0_15 = arith.constant 0 : index
    %c0_16 = arith.constant 0 : index
    %15 = vector.load %arg5[%c0_15, %c0_16] : memref<32x1xf32, #tpu.memory_space<vmem>>, vector<32x1xf32>
    %16 = vector.broadcast %15 : vector<32x1xf32> to vector<32x8xf32>
    %17 = arith.addf %14, %16 : vector<32x8xf32>
    %18 = vector.shape_cast %17 : vector<32x8xf32> to vector<4x8x8xf32>
    %19 = tpu.transpose %18, [0, 2, 1] : vector<4x8x8xf32> -> vector<4x8x8xf32>
    %cst_17 = arith.constant dense<0.000000e+00> : vector<4x8x16xf32>
    %20 = tpu.matmul %19, %9, %cst_17 {dimension_numbers = #tpu.dot_dimension_numbers<[2], [1], [1], [2], [0, 0, 0, 1, 1, 2], [0], [0]>} : vector<4x8x8xf32>, vector<4x8x16xf32>, vector<4x8x16xf32> -> vector<4x8x16xf32>
    %cst_18 = arith.constant dense<0xFF800000> : vector<4x8xf32>
    %21 = vector.multi_reduction <maximumf>, %20, %cst_18 [2] : vector<4x8x16xf32> to vector<4x8xf32>
    %22 = vector.shape_cast %21 : vector<4x8xf32> to vector<4x8x1xf32>
    %23 = vector.broadcast %22 : vector<4x8x1xf32> to vector<4x8x16xf32>
    %24 = arith.subf %20, %23 : vector<4x8x16xf32>
    %25 = math.exp %24 : vector<4x8x16xf32>
    %cst_19 = arith.constant dense<0.000000e+00> : vector<4x8xf32>
    %26 = vector.multi_reduction <add>, %25, %cst_19 [2] : vector<4x8x16xf32> to vector<4x8xf32>
    %27 = vector.shape_cast %26 : vector<4x8xf32> to vector<4x8x1xf32>
    %28 = tpu.reciprocal %27 : vector<4x8x1xf32> -> vector<4x8x1xf32>
    %29 = vector.broadcast %28 : vector<4x8x1xf32> to vector<4x8x16xf32>
    %30 = arith.mulf %25, %29 : vector<4x8x16xf32>
    %cst_20 = arith.constant dense<0.000000e+00> : vector<4x8x8xf32>
    %31 = tpu.matmul %10, %30, %cst_20 {dimension_numbers = #tpu.dot_dimension_numbers<[2], [2], [1], [1], [0, 0, 0, 1, 1, 1], [0], [0]>} : vector<4x8x16xf32>, vector<4x8x16xf32>, vector<4x8x8xf32> -> vector<4x8x8xf32>
    %32 = vector.shape_cast %31 : vector<4x8x8xf32> to vector<32x8xf32>
    %33 = tpu.transpose %32, [1, 0] : vector<32x8xf32> -> vector<8x32xf32>
    %c0_21 = arith.constant 0 : index
    %c0_22 = arith.constant 0 : index
    %34 = vector.load %arg9[%c0_21, %c0_22] : memref<32x32xf32, #tpu.memory_space<vmem>>, vector<32x32xf32>
    %cst_23 = arith.constant dense<0.000000e+00> : vector<8x32xf32>
    %35 = tpu.matmul %33, %34, %cst_23 {dimension_numbers = #tpu.dot_dimension_numbers<[1], [1], [0], [0], [0, 0, 1, 0], [], []>} : vector<8x32xf32>, vector<32x32xf32>, vector<8x32xf32> -> vector<8x32xf32>
    %c0_24 = arith.constant 0 : index
    %c0_25 = arith.constant 0 : index
    %36 = vector.load %arg10[%c0_24, %c0_25] : memref<1x32xf32, #tpu.memory_space<vmem>>, vector<1x32xf32>
    %37 = vector.broadcast %36 : vector<1x32xf32> to vector<8x32xf32>
    %38 = arith.addf %35, %37 : vector<8x32xf32>
    %c0_26 = arith.constant 0 : index
    %c0_27 = arith.constant 0 : index
    %c0_28 = arith.constant 0 : index
    %39 = vector.load %arg11[%c0_26, %c0_27, %c0_28] : memref<1x8x32xf32, #tpu.memory_space<vmem>>, vector<1x8x32xf32>
    %40 = vector.shape_cast %39 : vector<1x8x32xf32> to vector<8x32xf32>
    %41 = vector.shape_cast %38 : vector<8x32xf32> to vector<1x8x32xf32>
    tpu.vector_store %arg11[%c0_26, %c0_27, %c0_28], %41 {strides = array<i32>} : memref<1x8x32xf32, #tpu.memory_space<vmem>>, vector<1x8x32xf32>,
    return
  }
  func.func @transform_0(%arg0: i32, %arg1: i32) -> (i32, i32, i32) {
    %c0_i32 = arith.constant 0 : i32
    %c0_i32_0 = arith.constant 0 : i32
    return %arg0, %arg1, %c0_i32 : i32, i32, i32
  }
  func.func @transform_1(%arg0: i32, %arg1: i32) -> (i32, i32, i32) {
    %c0_i32 = arith.constant 0 : i32
    %c0_i32_0 = arith.constant 0 : i32
    %c0_i32_1 = arith.constant 0 : i32
    return %arg0, %c0_i32, %c0_i32_0 : i32, i32, i32
  }
  func.func @transform_2(%arg0: i32, %arg1: i32) -> (i32, i32) {
    %c0_i32 = arith.constant 0 : i32
    %c0_i32_0 = arith.constant 0 : i32
    %c0_i32_1 = arith.constant 0 : i32
    return %c0_i32, %c0_i32_0 : i32, i32
  }
  func.func @transform_3(%arg0: i32, %arg1: i32) -> (i32, i32) {
    %c0_i32 = arith.constant 0 : i32
    %c0_i32_0 = arith.constant 0 : i32
    %c0_i32_1 = arith.constant 0 : i32
    return %c0_i32, %c0_i32_0 : i32, i32
  }
  func.func @transform_4(%arg0: i32, %arg1: i32) -> (i32, i32) {
    %c0_i32 = arith.constant 0 : i32
    %c0_i32_0 = arith.constant 0 : i32
    %c0_i32_1 = arith.constant 0 : i32
    return %c0_i32, %c0_i32_0 : i32, i32
  }
  func.func @transform_5(%arg0: i32, %arg1: i32) -> (i32, i32) {
    %c0_i32 = arith.constant 0 : i32
    %c0_i32_0 = arith.constant 0 : i32
    %c0_i32_1 = arith.constant 0 : i32
    return %c0_i32, %c0_i32_0 : i32, i32
  }
  func.func @transform_6(%arg0: i32, %arg1: i32) -> (i32, i32) {
    %c0_i32 = arith.constant 0 : i32
    %c0_i32_0 = arith.constant 0 : i32
    %c0_i32_1 = arith.constant 0 : i32
    return %c0_i32, %c0_i32_0 : i32, i32
  }
  func.func @transform_7(%arg0: i32, %arg1: i32) -> (i32, i32) {
    %c0_i32 = arith.constant 0 : i32
    %c0_i32_0 = arith.constant 0 : i32
    %c0_i32_1 = arith.constant 0 : i32
    return %c0_i32, %c0_i32_0 : i32, i32
  }
  func.func @transform_8(%arg0: i32, %arg1: i32) -> (i32, i32) {
    %c0_i32 = arith.constant 0 : i32
    %c0_i32_0 = arith.constant 0 : i32
    %c0_i32_1 = arith.constant 0 : i32
    return %c0_i32, %c0_i32_0 : i32, i32
  }
  func.func @transform_9(%arg0: i32, %arg1: i32) -> (i32, i32, i32) {
    %c0_i32 = arith.constant 0 : i32
    %c0_i32_0 = arith.constant 0 : i32
    return %arg0, %arg1, %c0_i32 : i32, i32, i32
  }
}

</mosaic_0001>

<llo_original>
// kernel: tpu_custom_call.1
$region0: #{tpu_custom_call.1}
  #allocation0 [shape = 'u32[]', space=smem, size = 0x4, offset = 0x4, fixed_abs, tag = 'smem constant byte address 0x4 - core index']
  #allocation1 [shape = 'u32[72,128]{1,0:T(1,128)}', space=vmem, size = 0x9000, scoped, tag = 'internal scratch']
  %s0 = inlined_call_operand.hbm [shape: f32[2,8,32], index: 0, kind: input, shape index: {}]
  %s1 = inlined_call_operand.vmem [shape: f32[2,16,32], index: 1, kind: input, shape index: {}]
  %s2 = inlined_call_operand.vmem [shape: f32[32,32], index: 2, kind: input, shape index: {}]
  %s3 = inlined_call_operand.vmem [shape: f32[32,1], index: 3, kind: input, shape index: {}]
  %s4 = inlined_call_operand.hbm [shape: f32[32,32], index: 4, kind: input, shape index: {}]
  %s5 = inlined_call_operand.hbm [shape: f32[32,32], index: 5, kind: input, shape index: {}]
  %s6 = inlined_call_operand.vmem [shape: f32[32,1], index: 6, kind: input, shape index: {}]
  %s7 = inlined_call_operand.hbm [shape: f32[32,32], index: 7, kind: input, shape index: {}]
  %s8 = inlined_call_operand.vmem [shape: f32[1,32], index: 8, kind: input, shape index: {}]
  %s9 = inlined_call_operand.hbm [shape: f32[2,8,32], index: 9, kind: output, shape index: {}]
  %s10 = sld [smem:[#allocation0]]
  $region85: #{tpu_custom_call.1} parent=0
    _
  %s12 = ssub.s32 1, %s10
  %s13 = scalar_select 0, %s12, %s10
  $region1: #{tpu_custom_call.1} parent=0
    #allocation2 [shape = 'u8[8192]{0}', space=vmem, size = 0x2000, scoped, tag = 'input window, operand 0']
    #allocation3 [shape = 's32[2]{0}', space=sflag, size = 0x8, scoped, tag = 'scoped memory for tpu_custom_call.1']
    #allocation4 [shape = 's32[2]{0}', space=sflag, size = 0x8, scoped, tag = 'scoped memory for tpu_custom_call.1']
    #allocation5 [shape = 'u8[16384]{0}', space=vmem, size = 0x4000, scoped, tag = 'input window, operand 4, single buffered']
    #allocation6 [shape = 's32[1]{0}', space=sflag, size = 0x4, scoped, tag = 'scoped memory for tpu_custom_call.1']
    #allocation7 [shape = 'u8[16384]{0}', space=vmem, size = 0x4000, scoped, tag = 'input window, operand 5, single buffered']
    #allocation8 [shape = 'u8[16384]{0}', space=vmem, size = 0x4000, scoped, tag = 'input window, operand 7, single buffered']
    #allocation9 [shape = 's32[1]{0}', space=sflag, size = 0x4, scoped, tag = 'scoped memory for tpu_custom_call.1']
    #allocation10 [shape = 'u8[8192]{0}', space=vmem, size = 0x2000, scoped, tag = 'output window, operand 0']
    %14 = vsyncpa [#allocation3], 0
    %s15 = scalar_lea.sflag [#allocation3], 1
    %16 = vsyncpa %s15, 0
    %17 = vsyncpa [#allocation6], 0
    %18 = vsyncpa [#allocation9], 0
    %19 = vsyncpa [#allocation4], 0
    %s20 = scalar_lea.sflag [#allocation4], 1
    %21 = vsyncpa %s20, 0
    loop: start=0, step=1, limit=4
    $region2: #{tpu_custom_call.1} parent=1 // loop_pre_header
      _
    $region3: #{tpu_custom_call.1} parent=1 // loop_header
      %s23 = sphi 0, %s27
      %p24 = scmp.ge.s32.totalorder %s23, 4
      %s30 = sphi 0, %s42
      %s31 = sphi 0, %s38
      %s32 = sphi 0, %s30
      %s33 = sphi 0, %s31
      %s34 = sphi 0, %s32
      %s35 = sphi 0, %s33
      %s47 = sphi 0, %s49
      %s50 = sphi 0, %s47
      %s51 = sphi 0, %s50
      %s67 = sphi 0, %s51
      %s73 = sphi 0, %s75
      %s76 = sphi 0, %s73
      %s77 = sphi 0, %s76
      %s93 = sphi 0, %s77
      %s97 = sphi 0, %s97
      %s99 = sphi 0, %s97
      %s100 = sphi 0, %s99
      %s114 = sphi 0, %s100
      %s118 = sphi 0, %s118
      %s120 = sphi 0, %s118
      %s121 = sphi 0, %s120
      %s135 = sphi 0, %s121
      %s139 = sphi 0, %s139
      %s141 = sphi 0, %s139
      %s142 = sphi 0, %s141
      %s156 = sphi 0, %s142
      %s160 = sphi 0, %s160
      %s162 = sphi 0, %s160
      %s163 = sphi 0, %s162
      %s177 = sphi 0, %s163
      %s181 = sphi 0, %s181
      %s183 = sphi 0, %s181
      %s184 = sphi 0, %s183
      %s198 = sphi 0, %s184
      %s202 = sphi 0, %s202
      %s204 = sphi 0, %s202
      %s205 = sphi 0, %s204
      %s219 = sphi 0, %s205
      %s223 = sphi 0, %s223
      %s225 = sphi 0, %s223
      %s226 = sphi 0, %s225
      %s240 = sphi 0, %s226
      %s248 = sphi 0, %s250
      %s251 = sphi 0, %s248
      %s252 = sphi 0, %s251
      %s268 = sphi 0, %s252
    $region4: #{tpu_custom_call.1} parent=1 // loop_header_branch
      %26 = sbr.rel (%p24) target = $region8
    $region5: #{tpu_custom_call.1} parent=1 // loop_body
      %s28 = ssub.s32 %s23, 1
      %s29 = ssub.s32 %s23, 2
      %s36 = sadd.s32 1, %s31
      %p37 = scmp.ge.s32.totalorder %s36, 1
      %s38 = scalar_select %p37, 0, %s36
      %s39 = sadd.s32 1, %s30
      %s40 = scalar_select %p37, %s39, %s30
      %p41 = scmp.ge.s32.totalorder %s40, 2
      %s42 = scalar_select %p41, 0, %s40
      %s43 = ssub.s32 %s30, %s42
      %s44 = ssub.s32 %s31, %s38
      %s45 = sor.u32 %s43, %s44
      %p46 = scmp.eq.s32.totalorder %s45, 0
      %s48 = sadd.s32 %s47, 1
      %s49 = scalar_select %p46, %s47, %s48
      %p52 = pneg %p46
      %p53 = scmp.eq.s32.totalorder %s23, 1
      %p54 = por %p52, %p53
      %p55 = scmp.ne.s32.totalorder %s47, %s50
      %p56 = scmp.eq.s32.totalorder %s23, 0
      %p57 = por %p55, %p56
      %p58 = scmp.ne.s32.totalorder %s47, %s50
      %p59 = scmp.eq.s32.totalorder %s28, 1
      %p60 = por %p58, %p59
      %p61 = scmp.ne.s32.totalorder %s50, %s51
      %p62 = scmp.eq.s32.totalorder %s28, 0
      %p63 = por %p61, %p62
      %p64 = scmp.ne.s32.totalorder %s50, %s51
      %p65 = scmp.eq.s32.totalorder %s29, 1
      %p66 = por %p64, %p65
      %p68 = scmp.ne.s32.totalorder %s51, %s67
      %p69 = scmp.eq.s32.totalorder %s29, 0
      %p70 = por %p68, %p69
      %s71 = ssub.s32 %s30, %s42
      %p72 = scmp.eq.s32.totalorder %s71, 0
      %s74 = sadd.s32 %s73, 1
      %s75 = scalar_select %p72, %s73, %s74
      %p78 = pneg %p72
      %p79 = scmp.eq.s32.totalorder %s23, 1
      %p80 = por %p78, %p79
      %p81 = scmp.ne.s32.totalorder %s73, %s76
      %p82 = scmp.eq.s32.totalorder %s23, 0
      %p83 = por %p81, %p82
      %p84 = scmp.ne.s32.totalorder %s73, %s76
      %p85 = scmp.eq.s32.totalorder %s28, 1
      %p86 = por %p84, %p85
      %p87 = scmp.ne.s32.totalorder %s76, %s77
      %p88 = scmp.eq.s32.totalorder %s28, 0
      %p89 = por %p87, %p88
      %p90 = scmp.ne.s32.totalorder %s76, %s77
      %p91 = scmp.eq.s32.totalorder %s29, 1
      %p92 = por %p90, %p91
      %p94 = scmp.ne.s32.totalorder %s77, %s93
      %p95 = scmp.eq.s32.totalorder %s29, 0
      %p96 = por %p94, %p95
      %s98 = sadd.s32 %s97, 1
      %p101 = scmp.eq.s32.totalorder %s23, 1
      %p102 = scmp.ne.s32.totalorder %s97, %s99
      %p103 = scmp.eq.s32.totalorder %s23, 0
      %p104 = por %p102, %p103
      %p105 = scmp.ne.s32.totalorder %s97, %s99
      %p106 = scmp.eq.s32.totalorder %s28, 1
      %p107 = por %p105, %p106
      %p108 = scmp.ne.s32.totalorder %s99, %s100
      %p109 = scmp.eq.s32.totalorder %s28, 0
      %p110 = por %p108, %p109
      %p111 = scmp.ne.s32.totalorder %s99, %s100
      %p112 = scmp.eq.s32.totalorder %s29, 1
      %p113 = por %p111, %p112
      %p115 = scmp.ne.s32.totalorder %s100, %s114
      %p116 = scmp.eq.s32.totalorder %s29, 0
      %p117 = por %p115, %p116
      %s119 = sadd.s32 %s118, 1
      %p122 = scmp.eq.s32.totalorder %s23, 1
      %p123 = scmp.ne.s32.totalorder %s118, %s120
      %p124 = scmp.eq.s32.totalorder %s23, 0
      %p125 = por %p123, %p124
      %p126 = scmp.ne.s32.totalorder %s118, %s120
      %p127 = scmp.eq.s32.totalorder %s28, 1
      %p128 = por %p126, %p127
      %p129 = scmp.ne.s32.totalorder %s120, %s121
      %p130 = scmp.eq.s32.totalorder %s28, 0
      %p131 = por %p129, %p130
      %p132 = scmp.ne.s32.totalorder %s120, %s121
      %p133 = scmp.eq.s32.totalorder %s29, 1
      %p134 = por %p132, %p133
      %p136 = scmp.ne.s32.totalorder %s121, %s135
      %p137 = scmp.eq.s32.totalorder %s29, 0
      %p138 = por %p136, %p137
      %s140 = sadd.s32 %s139, 1
      %p143 = scmp.eq.s32.totalorder %s23, 1
      %p144 = scmp.ne.s32.totalorder %s139, %s141
      %p145 = scmp.eq.s32.totalorder %s23, 0
      %p146 = por %p144, %p145
      %p147 = scmp.ne.s32.totalorder %s139, %s141
      %p148 = scmp.eq.s32.totalorder %s28, 1
      %p149 = por %p147, %p148
      %p150 = scmp.ne.s32.totalorder %s141, %s142
      %p151 = scmp.eq.s32.totalorder %s28, 0
      %p152 = por %p150, %p151
      %p153 = scmp.ne.s32.totalorder %s141, %s142
      %p154 = scmp.eq.s32.totalorder %s29, 1
      %p155 = por %p153, %p154
      %p157 = scmp.ne.s32.totalorder %s142, %s156
      %p158 = scmp.eq.s32.totalorder %s29, 0
      %p159 = por %p157, %p158
      %s161 = sadd.s32 %s160, 1
      %p164 = scmp.eq.s32.totalorder %s23, 1
      %p165 = scmp.ne.s32.totalorder %s160, %s162
      %p166 = scmp.eq.s32.totalorder %s23, 0
      %p167 = por %p165, %p166
      %p168 = scmp.ne.s32.totalorder %s160, %s162
      %p169 = scmp.eq.s32.totalorder %s28, 1
      %p170 = por %p168, %p169
      %p171 = scmp.ne.s32.totalorder %s162, %s163
      %p172 = scmp.eq.s32.totalorder %s28, 0
      %p173 = por %p171, %p172
      %p174 = scmp.ne.s32.totalorder %s162, %s163
      %p175 = scmp.eq.s32.totalorder %s29, 1
      %p176 = por %p174, %p175
      %p178 = scmp.ne.s32.totalorder %s163, %s177
      %p179 = scmp.eq.s32.totalorder %s29, 0
      %p180 = por %p178, %p179
      %s182 = sadd.s32 %s181, 1
      %p185 = scmp.eq.s32.totalorder %s23, 1
      %p186 = scmp.ne.s32.totalorder %s181, %s183
      %p187 = scmp.eq.s32.totalorder %s23, 0
      %p188 = por %p186, %p187
      %p189 = scmp.ne.s32.totalorder %s181, %s183
      %p190 = scmp.eq.s32.totalorder %s28, 1
      %p191 = por %p189, %p190
      %p192 = scmp.ne.s32.totalorder %s183, %s184
      %p193 = scmp.eq.s32.totalorder %s28, 0
      %p194 = por %p192, %p193
      %p195 = scmp.ne.s32.totalorder %s183, %s184
      %p196 = scmp.eq.s32.totalorder %s29, 1
      %p197 = por %p195, %p196
      %p199 = scmp.ne.s32.totalorder %s184, %s198
      %p200 = scmp.eq.s32.totalorder %s29, 0
      %p201 = por %p199, %p200
      %s203 = sadd.s32 %s202, 1
      %p206 = scmp.eq.s32.totalorder %s23, 1
      %p207 = scmp.ne.s32.totalorder %s202, %s204
      %p208 = scmp.eq.s32.totalorder %s23, 0
      %p209 = por %p207, %p208
      %p210 = scmp.ne.s32.totalorder %s202, %s204
      %p211 = scmp.eq.s32.totalorder %s28, 1
      %p212 = por %p210, %p211
      %p213 = scmp.ne.s32.totalorder %s204, %s205
      %p214 = scmp.eq.s32.totalorder %s28, 0
      %p215 = por %p213, %p214
      %p216 = scmp.ne.s32.totalorder %s204, %s205
      %p217 = scmp.eq.s32.totalorder %s29, 1
      %p218 = por %p216, %p217
      %p220 = scmp.ne.s32.totalorder %s205, %s219
      %p221 = scmp.eq.s32.totalorder %s29, 0
      %p222 = por %p220, %p221
      %s224 = sadd.s32 %s223, 1
      %p227 = scmp.eq.s32.totalorder %s23, 1
      %p228 = scmp.ne.s32.totalorder %s223, %s225
      %p229 = scmp.eq.s32.totalorder %s23, 0
      %p230 = por %p228, %p229
      %p231 = scmp.ne.s32.totalorder %s223, %s225
      %p232 = scmp.eq.s32.totalorder %s28, 1
      %p233 = por %p231, %p232
      %p234 = scmp.ne.s32.totalorder %s225, %s226
      %p235 = scmp.eq.s32.totalorder %s28, 0
      %p236 = por %p234, %p235
      %p237 = scmp.ne.s32.totalorder %s225, %s226
      %p238 = scmp.eq.s32.totalorder %s29, 1
      %p239 = por %p237, %p238
      %p241 = scmp.ne.s32.totalorder %s226, %s240
      %p242 = scmp.eq.s32.totalorder %s29, 0
      %p243 = por %p241, %p242
      %s244 = ssub.s32 %s30, %s42
      %s245 = ssub.s32 %s31, %s38
      %s246 = sor.u32 %s244, %s245
      %p247 = scmp.eq.s32.totalorder %s246, 0
      %s249 = sadd.s32 %s248, 1
      %s250 = scalar_select %p247, %s248, %s249
      %p253 = pneg %p247
      %p254 = scmp.eq.s32.totalorder %s23, 1
      %p255 = por %p253, %p254
      %p256 = scmp.ne.s32.totalorder %s248, %s251
      %p257 = scmp.eq.s32.totalorder %s23, 0
      %p258 = por %p256, %p257
      %p259 = scmp.ne.s32.totalorder %s248, %s251
      %p260 = scmp.eq.s32.totalorder %s28, 1
      %p261 = por %p259, %p260
      %p262 = scmp.ne.s32.totalorder %s251, %s252
      %p263 = scmp.eq.s32.totalorder %s28, 0
      %p264 = por %p262, %p263
      %p265 = scmp.ne.s32.totalorder %s251, %s252
      %p266 = scmp.eq.s32.totalorder %s29, 1
      %p267 = por %p265, %p266
      %p269 = scmp.ne.s32.totalorder %s252, %s268
      %p270 = scmp.eq.s32.totalorder %s29, 0
      %p271 = por %p269, %p270
      %p272 = scmp.le.s32.totalorder 1, %s23
      %p273 = scmp.lt.s32.totalorder %s23, 3
      %p274 = pnand %p272, %p273
      %p275 = pneg %p274
      // Predicated region
      $region9: #{tpu_custom_call.1} parent=5 // pred_check
        _
      $region10: #{tpu_custom_call.1} parent=5 // pred_check_branch
        %277 = sbr.rel (%p274) target = $region12
      $region11: #{tpu_custom_call.1} parent=5 // pred_region
        %s278 = ssub.s32 %s23, 1
        // Predicated region
        $region13: #{tpu_custom_call.1} parent=11 // pred_check
          %p279 = pneg %p110
        $region14: #{tpu_custom_call.1} parent=11 // pred_check_branch
          %281 = sbr.rel (%p279) target = $region16
        $region15: #{tpu_custom_call.1} parent=11 // pred_region
          _
        $region16: #{tpu_custom_call.1} parent=11 // pred_fallthru
          _
        // Predicated region
        $region17: #{tpu_custom_call.1} parent=11 // pred_check
          %p282 = pneg %p131
        $region18: #{tpu_custom_call.1} parent=11 // pred_check_branch
          %284 = sbr.rel (%p282) target = $region20
        $region19: #{tpu_custom_call.1} parent=11 // pred_region
          _
        $region20: #{tpu_custom_call.1} parent=11 // pred_fallthru
          _
        // Predicated region
        $region21: #{tpu_custom_call.1} parent=11 // pred_check
          %p285 = pneg %p152
        $region22: #{tpu_custom_call.1} parent=11 // pred_check_branch
          %287 = sbr.rel (%p285) target = $region24
        $region23: #{tpu_custom_call.1} parent=11 // pred_region
          %289 = vsyncadd [#allocation6], 0
          %s290 = sshll.u32 %s4, 4
          %s291 = int_to_ptr.hbm [resolvable:$true] %s290
          %s292 = sshll.u32 [#allocation5], 4
          %s293 = int_to_ptr.vmem [resolvable:$true] %s292
          %298 = dma.hbm_to_vmem [thread:$0]  %s291, 512, %s293, [#allocation6], 128, 128, 8
        $region24: #{tpu_custom_call.1} parent=11 // pred_fallthru
          _
        // Predicated region
        $region25: #{tpu_custom_call.1} parent=11 // pred_check
          %p299 = pneg %p173
        $region26: #{tpu_custom_call.1} parent=11 // pred_check_branch
          %301 = sbr.rel (%p299) target = $region28
        $region27: #{tpu_custom_call.1} parent=11 // pred_region
          %303 = vsyncadd [#allocation6], 0
          %s304 = sshll.u32 %s5, 4
          %s305 = int_to_ptr.hbm [resolvable:$true] %s304
          %s306 = sshll.u32 [#allocation7], 4
          %s307 = int_to_ptr.vmem [resolvable:$true] %s306
          %312 = dma.hbm_to_vmem [thread:$0]  %s305, 512, %s307, [#allocation6], 128, 128, 8
        $region28: #{tpu_custom_call.1} parent=11 // pred_fallthru
          _
        // Predicated region
        $region29: #{tpu_custom_call.1} parent=11 // pred_check
          %p313 = pneg %p194
        $region30: #{tpu_custom_call.1} parent=11 // pred_check_branch
          %315 = sbr.rel (%p313) target = $region32
        $region31: #{tpu_custom_call.1} parent=11 // pred_region
          _
        $region32: #{tpu_custom_call.1} parent=11 // pred_fallthru
          _
        // Predicated region
        $region33: #{tpu_custom_call.1} parent=11 // pred_check
          %p316 = pneg %p215
        $region34: #{tpu_custom_call.1} parent=11 // pred_check_branch
          %318 = sbr.rel (%p316) target = $region36
        $region35: #{tpu_custom_call.1} parent=11 // pred_region
          %320 = vsyncadd [#allocation9], 0
          %s321 = sshll.u32 %s7, 4
          %s322 = int_to_ptr.hbm [resolvable:$true] %s321
          %s323 = sshll.u32 [#allocation8], 4
          %s324 = int_to_ptr.vmem [resolvable:$true] %s323
          %329 = dma.hbm_to_vmem [thread:$0]  %s322, 512, %s324, [#allocation9], 128, 128, 8
        $region36: #{tpu_custom_call.1} parent=11 // pred_fallthru
          _
        // Predicated region
        $region37: #{tpu_custom_call.1} parent=11 // pred_check
          %p330 = pneg %p236
        $region38: #{tpu_custom_call.1} parent=11 // pred_check_branch
          %332 = sbr.rel (%p330) target = $region40
        $region39: #{tpu_custom_call.1} parent=11 // pred_region
          _
        $region40: #{tpu_custom_call.1} parent=11 // pred_fallthru
          _
      $region12: #{tpu_custom_call.1} parent=5 // pred_fallthru
        _
      %p333 = scmp.lt.s32.totalorder %s23, 2
      // Predicated region
      $region41: #{tpu_custom_call.1} parent=5 // pred_check
        %p334 = pneg %p333
      $region42: #{tpu_custom_call.1} parent=5 // pred_check_branch
        %336 = sbr.rel (%p334) target = $region44
      $region43: #{tpu_custom_call.1} parent=5 // pred_region
        // Predicated region
        $region45: #{tpu_custom_call.1} parent=43 // pred_check
          %p337 = pneg %p57
        $region46: #{tpu_custom_call.1} parent=43 // pred_check_branch
          %339 = sbr.rel (%p337) target = $region48
        $region47: #{tpu_custom_call.1} parent=43 // pred_region
          %s340 = sand.u32 %s47, 1
          %s341 = scalar_lea.sflag [#allocation3], %s340
          %s342 = sand.u32 %s47, 1
          %s343 = smul.addr %s342, 8
          %s344 = scalar_lea.vmem [#allocation2], %s343
          %346 = vsyncadd %s341, 0
          %s347 = sadd.s32 %s31, %s30
          %s348 = smul.addr %s347, 8
          %s349 = scalar_lea.hbm %s0, %s348
          %s351 = sshll.u32 %s349, 4
          %s352 = int_to_ptr.hbm [resolvable:$true] %s351
          %s353 = sshll.u32 %s344, 4
          %s354 = int_to_ptr.vmem [resolvable:$true] %s353
          %356 = dma.hbm_to_vmem [thread:$0]  %s352, 128, %s354, %s341
        $region48: #{tpu_custom_call.1} parent=43 // pred_fallthru
          _
        // Predicated region
        $region49: #{tpu_custom_call.1} parent=43 // pred_check
          %p357 = pneg %p83
        $region50: #{tpu_custom_call.1} parent=43 // pred_check_branch
          %359 = sbr.rel (%p357) target = $region52
        $region51: #{tpu_custom_call.1} parent=43 // pred_region
          %p360 = scmp.lt.s32.totalorder %s30, 1
          %s361 = scalar_select %p360, %s30, 1
          %s362 = smul.addr %s361, 2
          %s363 = smul.addr %s362, 8
          %s364 = scalar_lea.vmem %s1, %s363
        $region52: #{tpu_custom_call.1} parent=43 // pred_fallthru
          _
      $region44: #{tpu_custom_call.1} parent=5 // pred_fallthru
        _
      %p365 = scmp.le.s32.totalorder 1, %s23
      %p366 = scmp.lt.s32.totalorder %s23, 3
      %p367 = pnand %p365, %p366
      %p368 = pneg %p367
      // Predicated region
      $region53: #{tpu_custom_call.1} parent=5 // pred_check
        _
      $region54: #{tpu_custom_call.1} parent=5 // pred_check_branch
        %370 = sbr.rel (%p367) target = $region56
      $region55: #{tpu_custom_call.1} parent=5 // pred_region
        %s371 = ssub.s32 %s23, 1
        %s372 = sand.u32 %s50, 1
        %s373 = scalar_lea.sflag [#allocation3], %s372
        %s374 = sand.u32 %s50, 1
        %s375 = smul.addr %s374, 8
        %s376 = scalar_lea.vmem [#allocation2], %s375
        // Predicated region
        $region57: #{tpu_custom_call.1} parent=55 // pred_check
          %p377 = pneg %p63
        $region58: #{tpu_custom_call.1} parent=55 // pred_check_branch
          %379 = sbr.rel (%p377) target = $region60
        $region59: #{tpu_custom_call.1} parent=55 // pred_region
          %381 = dma.done %s373, 128
        $region60: #{tpu_custom_call.1} parent=55 // pred_fallthru
          _
        // Predicated region
        $region61: #{tpu_custom_call.1} parent=55 // pred_check
          %p382 = pneg %p152
        $region62: #{tpu_custom_call.1} parent=55 // pred_check_branch
          %384 = sbr.rel (%p382) target = $region64
        $region63: #{tpu_custom_call.1} parent=55 // pred_region
          %386 = dma.done [#allocation6], 512
        $region64: #{tpu_custom_call.1} parent=55 // pred_fallthru
          _
        // Predicated region
        $region65: #{tpu_custom_call.1} parent=55 // pred_check
          %p387 = pneg %p173
        $region66: #{tpu_custom_call.1} parent=55 // pred_check_branch
          %389 = sbr.rel (%p387) target = $region68
        $region67: #{tpu_custom_call.1} parent=55 // pred_region
          %391 = dma.done [#allocation6], 512
        $region68: #{tpu_custom_call.1} parent=55 // pred_fallthru
          _
        // Predicated region
        $region69: #{tpu_custom_call.1} parent=55 // pred_check
          %p392 = pneg %p215
        $region70: #{tpu_custom_call.1} parent=55 // pred_check_branch
          %394 = sbr.rel (%p392) target = $region72
        $region71: #{tpu_custom_call.1} parent=55 // pred_region
          %396 = dma.done [#allocation9], 512
        $region72: #{tpu_custom_call.1} parent=55 // pred_fallthru
          _
        %s397 = sand.u32 %s50, 1
        %s398 = scalar_lea.sflag [#allocation3], %s397
        %s399 = sand.u32 %s50, 1
        %s400 = smul.addr %s399, 8
        %s401 = scalar_lea.vmem [#allocation2], %s400
        %p402 = pneg %p63
        %p403 = pneg %p60
        %p404 = scmp.lt.s32.totalorder %s32, 1
        %s405 = scalar_select %p404, %s32, 1
        %s406 = smul.addr %s405, 2
        %s407 = smul.addr %s406, 8
        %s408 = scalar_lea.vmem %s1, %s407
        %p409 = pneg %p89
        %p410 = pneg %p86
        %p411 = pneg %p110
        %p412 = pneg %p107
        %p413 = pneg %p131
        %p414 = pneg %p128
        %p415 = pneg %p152
        %p416 = pneg %p149
        %p417 = pneg %p173
        %p418 = pneg %p170
        %p419 = pneg %p194
        %p420 = pneg %p191
        %p421 = pneg %p215
        %p422 = pneg %p212
        %p423 = pneg %p236
        %p424 = pneg %p233
        %p425 = pneg %p264
        %p426 = pneg %p261
        %s427 = sand.u32 %s251, 1
        %s428 = scalar_lea.sflag [#allocation4], %s427
        %s429 = sand.u32 %s251, 1
        %s430 = smul.addr %s429, 8
        %s431 = scalar_lea.vmem [#allocation10], %s430
        %p432 = scmp.lt.s32.totalorder %s32, 1
        %s433 = scalar_select %p432, %s32, 1
        %s434 = smul.addr %s433, 2
        %s435 = smul.addr %s434, 8
        %s436 = scalar_lea.vmem %s1, %s435
        %v437 = vld [vmem:[%s436] sm:$0xff]
        %v438 = vld [vmem:[%s436 + $0x8] sm:$0xff]
        %v439 = vld [vmem:[#allocation5] sm:$0xff]
        %v440 = vld [vmem:[#allocation5 + $0x8] sm:$0xff]
        %v441 = vld [vmem:[#allocation5 + $0x10] sm:$0xff]
        %v442 = vld [vmem:[#allocation5 + $0x18] sm:$0xff]
        %vm443 = vcmask 261120
        %v445 = vsel %vm443, %v439, 0
        %v448 = vsel %vm443, %v440, 0
        %v451 = vsel %vm443, %v441, 0
        %v454 = vsel %vm443, %v442, 0
        %v457 = vsel %vm443, %v437, 0
        %v460 = vsel %vm443, %v438, 0
        %462 = vmatpush.xpose.msra.mxu0 0.0
        %463 = vmatpush.xpose.msra.mxu0 0.0
        %464 = vmatpush.xpose.msra.mxu0 0.0
        %465 = vmatpush.xpose.msra.mxu0 0.0
        %466 = vmatpush.xpose.msra.mxu0 0.0
        %467 = vmatpush.xpose.msra.mxu0 0.0
        %468 = vmatpush.xpose.msra.mxu0 0.0
        %469 = vmatpush.xpose.msra.mxu0 0.0
        %470 = vmatpush.xpose.msra.mxu0 0.0
        %471 = vmatpush.xpose.msra.mxu0 0.0
        %472 = vmatpush.xpose.msra.mxu0 0.0
        %473 = vmatpush.xpose.msra.mxu0 0.0
        %474 = vmatpush.xpose.msra.mxu0 0.0
        %475 = vmatpush.xpose.msra.mxu0 0.0
        %476 = vmatpush.xpose.msra.mxu0 %v460
        %477 = vmatpush.xpose.msra.mxu0 %v457
        %478 = vmatmul.f32.gmra.mxu0 %v445
        %v479 = vpop.f32.mrf.mxu0
        %v480 = vadd.f32 0.0, %v479
        %481 = vmatmul.f32.gmra.mxu0 %v448
        %v482 = vpop.f32.mrf.mxu0
        %v483 = vadd.f32 0.0, %v482
        %484 = vmatmul.f32.gmra.mxu0 %v451
        %v485 = vpop.f32.mrf.mxu0
        %v486 = vadd.f32 0.0, %v485
        %487 = vmatmul.f32.gmra.mxu0 %v454
        %v488 = vpop.f32.mrf.mxu0
        %v489 = vadd.f32 0.0, %v488
        %490 = vdwg.mxu0
        %v491 = vld [vmem:[#allocation7] sm:$0xff]
        %v492 = vld [vmem:[#allocation7 + $0x8] sm:$0xff]
        %v493 = vld [vmem:[#allocation7 + $0x10] sm:$0xff]
        %v494 = vld [vmem:[#allocation7 + $0x18] sm:$0xff]
        %v495 = vld [vmem:[%s6] sm:$0xff]
        %v496 = vld [vmem:[%s6 + $0x8] sm:$0xff]
        %v497 = vld [vmem:[%s6 + $0x10] sm:$0xff]
        %v498 = vld [vmem:[%s6 + $0x18] sm:$0xff]
        %500 = vset.pattern.permute.xlu0 0
        %501 = vperm.xlu0 %500, %v495
        %v502 = vpop.permute.xlu0 %501
        %505 = vset.pattern.permute.xlu0 0
        %506 = vperm.xlu0 %505, %v496
        %v507 = vpop.permute.xlu0 %506
        %510 = vset.pattern.permute.xlu0 0
        %511 = vperm.xlu0 %510, %v497
        %v512 = vpop.permute.xlu0 %511
        %515 = vset.pattern.permute.xlu0 0
        %516 = vperm.xlu0 %515, %v498
        %v517 = vpop.permute.xlu0 %516
        %v520 = vsel %vm443, %v491, 0
        %v523 = vsel %vm443, %v492, 0
        %v526 = vsel %vm443, %v493, 0
        %v529 = vsel %vm443, %v494, 0
        %531 = vmatpush.xpose.msra.mxu0 0.0
        %532 = vmatpush.xpose.msra.mxu0 0.0
        %533 = vmatpush.xpose.msra.mxu0 0.0
        %534 = vmatpush.xpose.msra.mxu0 0.0
        %535 = vmatpush.xpose.msra.mxu0 0.0
        %536 = vmatpush.xpose.msra.mxu0 0.0
        %537 = vmatpush.xpose.msra.mxu0 0.0
        %538 = vmatpush.xpose.msra.mxu0 0.0
        %539 = vmatpush.xpose.msra.mxu0 0.0
        %540 = vmatpush.xpose.msra.mxu0 0.0
        %541 = vmatpush.xpose.msra.mxu0 0.0
        %542 = vmatpush.xpose.msra.mxu0 0.0
        %543 = vmatpush.xpose.msra.mxu0 0.0
        %544 = vmatpush.xpose.msra.mxu0 0.0
        %545 = vmatpush.xpose.msra.mxu0 %v460
        %546 = vmatpush.xpose.msra.mxu0 %v457
        %547 = vmatmul.f32.gmra.mxu0 %v520
        %v548 = vpop.f32.mrf.mxu0
        %v549 = vadd.f32 %v502, %v548
        %550 = vmatmul.f32.gmra.mxu0 %v523
        %v551 = vpop.f32.mrf.mxu0
        %v552 = vadd.f32 %v507, %v551
        %553 = vmatmul.f32.gmra.mxu0 %v526
        %v554 = vpop.f32.mrf.mxu0
        %v555 = vadd.f32 %v512, %v554
        %556 = vmatmul.f32.gmra.mxu0 %v529
        %v557 = vpop.f32.mrf.mxu0
        %v558 = vadd.f32 %v517, %v557
        %559 = vdwg.mxu0
        %v560 = vld [vmem:[%s376] sm:$0xff]
        %v561 = vld [vmem:[%s2] sm:$0xff]
        %v562 = vld [vmem:[%s2 + $0x8] sm:$0xff]
        %v563 = vld [vmem:[%s2 + $0x10] sm:$0xff]
        %v564 = vld [vmem:[%s2 + $0x18] sm:$0xff]
        %v565 = vld [vmem:[%s3] sm:$0xff]
        %v566 = vld [vmem:[%s3 + $0x8] sm:$0xff]
        %v567 = vld [vmem:[%s3 + $0x10] sm:$0xff]
        %v568 = vld [vmem:[%s3 + $0x18] sm:$0xff]
        %570 = vset.pattern.permute.xlu0 0
        %571 = vperm.xlu0 %570, %v565
        %v572 = vpop.permute.xlu0 %571
        %575 = vset.pattern.permute.xlu0 0
        %576 = vperm.xlu0 %575, %v566
        %v577 = vpop.permute.xlu0 %576
        %580 = vset.pattern.permute.xlu0 0
        %581 = vperm.xlu0 %580, %v567
        %v582 = vpop.permute.xlu0 %581
        %585 = vset.pattern.permute.xlu0 0
        %586 = vperm.xlu0 %585, %v568
        %v587 = vpop.permute.xlu0 %586
        %v590 = vsel %vm443, %v561, 0
        %v593 = vsel %vm443, %v562, 0
        %v596 = vsel %vm443, %v563, 0
        %v599 = vsel %vm443, %v564, 0
        %v602 = vsel %vm443, %v560, 0
        %604 = vmatpush.xpose.msra.mxu0 0.0
        %605 = vmatpush.xpose.msra.mxu0 0.0
        %606 = vmatpush.xpose.msra.mxu0 0.0
        %607 = vmatpush.xpose.msra.mxu0 0.0
        %608 = vmatpush.xpose.msra.mxu0 0.0
        %609 = vmatpush.xpose.msra.mxu0 0.0
        %610 = vmatpush.xpose.msra.mxu0 0.0
        %611 = vmatpush.xpose.msra.mxu0 0.0
        %612 = vmatpush.xpose.msra.mxu0 0.0
        %613 = vmatpush.xpose.msra.mxu0 0.0
        %614 = vmatpush.xpose.msra.mxu0 0.0
        %615 = vmatpush.xpose.msra.mxu0 0.0
        %616 = vmatpush.xpose.msra.mxu0 0.0
        %617 = vmatpush.xpose.msra.mxu0 0.0
        %618 = vmatpush.xpose.msra.mxu0 0.0
        %619 = vmatpush.xpose.msra.mxu0 %v602
        %620 = vmatmul.f32.gmra.mxu0 %v590
        %v621 = vpop.f32.mrf.mxu0
        %v622 = vadd.f32 %v572, %v621
        %623 = vmatmul.f32.gmra.mxu0 %v593
        %v624 = vpop.f32.mrf.mxu0
        %v625 = vadd.f32 %v577, %v624
        %626 = vmatmul.f32.gmra.mxu0 %v596
        %v627 = vpop.f32.mrf.mxu0
        %v628 = vadd.f32 %v582, %v627
        %629 = vmatmul.f32.gmra.mxu0 %v599
        %v630 = vpop.f32.mrf.mxu0
        %v631 = vadd.f32 %v587, %v630
        %632 = vdwg.mxu0
        %633 = vxpose.xlu0.b32.start [1/16] %v622, 128
        %634 = vxpose.xlu0.b32.cont [2/16] 0.0, 128
        %635 = vxpose.xlu0.b32.cont [3/16] 0.0, 128
        %636 = vxpose.xlu0.b32.cont [4/16] 0.0, 128
        %637 = vxpose.xlu0.b32.cont [5/16] 0.0, 128
        %638 = vxpose.xlu0.b32.cont [6/16] 0.0, 128
        %639 = vxpose.xlu0.b32.cont [7/16] 0.0, 128
        %640 = vxpose.xlu0.b32.cont [8/16] 0.0, 128
        %641 = vxpose.xlu0.b32.cont [9/16] 0.0, 128
        %642 = vxpose.xlu0.b32.cont [10/16] 0.0, 128
        %643 = vxpose.xlu0.b32.cont [11/16] 0.0, 128
        %644 = vxpose.xlu0.b32.cont [12/16] 0.0, 128
        %645 = vxpose.xlu0.b32.cont [13/16] 0.0, 128
        %646 = vxpose.xlu0.b32.cont [14/16] 0.0, 128
        %647 = vxpose.xlu0.b32.cont [15/16] 0.0, 128
        %648 = vxpose.xlu0.b32.end [16/16] 0.0, 128
        %v649 = vpop.trf.xlu0
        %v650 = vpop.trf.xlu0
        %v651 = vpop.trf.xlu0
        %v652 = vpop.trf.xlu0
        %v653 = vpop.trf.xlu0
        %v654 = vpop.trf.xlu0
        %v655 = vpop.trf.xlu0
        %v656 = vpop.trf.xlu0
        %v657 = vpop.trf.xlu0
        %v658 = vpop.trf.xlu0
        %v659 = vpop.trf.xlu0
        %v660 = vpop.trf.xlu0
        %v661 = vpop.trf.xlu0
        %v662 = vpop.trf.xlu0
        %v663 = vpop.trf.xlu0
        %v664 = vpop.trf.xlu0
        %665 = vxpose.xlu0.b32.start [1/16] %v625, 128
        %666 = vxpose.xlu0.b32.cont [2/16] 0.0, 128
        %667 = vxpose.xlu0.b32.cont [3/16] 0.0, 128
        %668 = vxpose.xlu0.b32.cont [4/16] 0.0, 128
        %669 = vxpose.xlu0.b32.cont [5/16] 0.0, 128
        %670 = vxpose.xlu0.b32.cont [6/16] 0.0, 128
        %671 = vxpose.xlu0.b32.cont [7/16] 0.0, 128
        %672 = vxpose.xlu0.b32.cont [8/16] 0.0, 128
        %673 = vxpose.xlu0.b32.cont [9/16] 0.0, 128
        %674 = vxpose.xlu0.b32.cont [10/16] 0.0, 128
        %675 = vxpose.xlu0.b32.cont [11/16] 0.0, 128
        %676 = vxpose.xlu0.b32.cont [12/16] 0.0, 128
        %677 = vxpose.xlu0.b32.cont [13/16] 0.0, 128
        %678 = vxpose.xlu0.b32.cont [14/16] 0.0, 128
        %679 = vxpose.xlu0.b32.cont [15/16] 0.0, 128
        %680 = vxpose.xlu0.b32.end [16/16] 0.0, 128
        %v681 = vpop.trf.xlu0
        %v682 = vpop.trf.xlu0
        %v683 = vpop.trf.xlu0
        %v684 = vpop.trf.xlu0
        %v685 = vpop.trf.xlu0
        %v686 = vpop.trf.xlu0
        %v687 = vpop.trf.xlu0
        %v688 = vpop.trf.xlu0
        %v689 = vpop.trf.xlu0
        %v690 = vpop.trf.xlu0
        %v691 = vpop.trf.xlu0
        %v692 = vpop.trf.xlu0
        %v693 = vpop.trf.xlu0
        %v694 = vpop.trf.xlu0
        %v695 = vpop.trf.xlu0
        %v696 = vpop.trf.xlu0
        %697 = vxpose.xlu0.b32.start [1/16] %v628, 128
        %698 = vxpose.xlu0.b32.cont [2/16] 0.0, 128
        %699 = vxpose.xlu0.b32.cont [3/16] 0.0, 128
        %700 = vxpose.xlu0.b32.cont [4/16] 0.0, 128
        %701 = vxpose.xlu0.b32.cont [5/16] 0.0, 128
        %702 = vxpose.xlu0.b32.cont [6/16] 0.0, 128
        %703 = vxpose.xlu0.b32.cont [7/16] 0.0, 128
        %704 = vxpose.xlu0.b32.cont [8/16] 0.0, 128
        %705 = vxpose.xlu0.b32.cont [9/16] 0.0, 128
        %706 = vxpose.xlu0.b32.cont [10/16] 0.0, 128
        %707 = vxpose.xlu0.b32.cont [11/16] 0.0, 128
        %708 = vxpose.xlu0.b32.cont [12/16] 0.0, 128
        %709 = vxpose.xlu0.b32.cont [13/16] 0.0, 128
        %710 = vxpose.xlu0.b32.cont [14/16] 0.0, 128
        %711 = vxpose.xlu0.b32.cont [15/16] 0.0, 128
        %712 = vxpose.xlu0.b32.end [16/16] 0.0, 128
        %v713 = vpop.trf.xlu0
        %v714 = vpop.trf.xlu0
        %v715 = vpop.trf.xlu0
        %v716 = vpop.trf.xlu0
        %v717 = vpop.trf.xlu0
        %v718 = vpop.trf.xlu0
        %v719 = vpop.trf.xlu0
        %v720 = vpop.trf.xlu0
        %v721 = vpop.trf.xlu0
        %v722 = vpop.trf.xlu0
        %v723 = vpop.trf.xlu0
        %v724 = vpop.trf.xlu0
        %v725 = vpop.trf.xlu0
        %v726 = vpop.trf.xlu0
        %v727 = vpop.trf.xlu0
        %v728 = vpop.trf.xlu0
        %729 = vxpose.xlu0.b32.start [1/16] %v631, 128
        %730 = vxpose.xlu0.b32.cont [2/16] 0.0, 128
        %731 = vxpose.xlu0.b32.cont [3/16] 0.0, 128
        %732 = vxpose.xlu0.b32.cont [4/16] 0.0, 128
        %733 = vxpose.xlu0.b32.cont [5/16] 0.0, 128
        %734 = vxpose.xlu0.b32.cont [6/16] 0.0, 128
        %735 = vxpose.xlu0.b32.cont [7/16] 0.0, 128
        %736 = vxpose.xlu0.b32.cont [8/16] 0.0, 128
        %737 = vxpose.xlu0.b32.cont [9/16] 0.0, 128
        %738 = vxpose.xlu0.b32.cont [10/16] 0.0, 128
        %739 = vxpose.xlu0.b32.cont [11/16] 0.0, 128
        %740 = vxpose.xlu0.b32.cont [12/16] 0.0, 128
        %741 = vxpose.xlu0.b32.cont [13/16] 0.0, 128
        %742 = vxpose.xlu0.b32.cont [14/16] 0.0, 128
        %743 = vxpose.xlu0.b32.cont [15/16] 0.0, 128
        %744 = vxpose.xlu0.b32.end [16/16] 0.0, 128
        %v745 = vpop.trf.xlu0
        %v746 = vpop.trf.xlu0
        %v747 = vpop.trf.xlu0
        %v748 = vpop.trf.xlu0
        %v749 = vpop.trf.xlu0
        %v750 = vpop.trf.xlu0
        %v751 = vpop.trf.xlu0
        %v752 = vpop.trf.xlu0
        %v753 = vpop.trf.xlu0
        %v754 = vpop.trf.xlu0
        %v755 = vpop.trf.xlu0
        %v756 = vpop.trf.xlu0
        %v757 = vpop.trf.xlu0
        %v758 = vpop.trf.xlu0
        %v759 = vpop.trf.xlu0
        %v760 = vpop.trf.xlu0
        %vm761 = vcmask 64512
        %v763 = vsel %vm761, %v649, 0
        %765 = vmatpush.msra.mxu0 0.0
        %766 = vmatpush.msra.mxu0 0.0
        %767 = vmatpush.msra.mxu0 0.0
        %768 = vmatpush.msra.mxu0 0.0
        %769 = vmatpush.msra.mxu0 0.0
        %770 = vmatpush.msra.mxu0 0.0
        %771 = vmatpush.msra.mxu0 0.0
        %772 = vmatpush.msra.mxu0 0.0
        %773 = vmatpush.msra.mxu0 0.0
        %774 = vmatpush.msra.mxu0 0.0
        %775 = vmatpush.msra.mxu0 0.0
        %776 = vmatpush.msra.mxu0 0.0
        %777 = vmatpush.msra.mxu0 0.0
        %778 = vmatpush.msra.mxu0 0.0
        %779 = vmatpush.msra.mxu0 0.0
        %780 = vmatpush.msra.mxu0 %v480
        %781 = vmatmul.f32.gmra.mxu0 %v763
        %v782 = vpop.f32.mrf.mxu0
        %v783 = vadd.f32 0.0, %v782
        %784 = vdwg.mxu0
        %v786 = vsel %vm761, %v681, 0
        %788 = vmatpush.msra.mxu0 0.0
        %789 = vmatpush.msra.mxu0 0.0
        %790 = vmatpush.msra.mxu0 0.0
        %791 = vmatpush.msra.mxu0 0.0
        %792 = vmatpush.msra.mxu0 0.0
        %793 = vmatpush.msra.mxu0 0.0
        %794 = vmatpush.msra.mxu0 0.0
        %795 = vmatpush.msra.mxu0 0.0
        %796 = vmatpush.msra.mxu0 0.0
        %797 = vmatpush.msra.mxu0 0.0
        %798 = vmatpush.msra.mxu0 0.0
        %799 = vmatpush.msra.mxu0 0.0
        %800 = vmatpush.msra.mxu0 0.0
        %801 = vmatpush.msra.mxu0 0.0
        %802 = vmatpush.msra.mxu0 0.0
        %803 = vmatpush.msra.mxu0 %v483
        %804 = vmatmul.f32.gmra.mxu0 %v786
        %v805 = vpop.f32.mrf.mxu0
        %v806 = vadd.f32 0.0, %v805
        %807 = vdwg.mxu0
        %v809 = vsel %vm761, %v713, 0
        %811 = vmatpush.msra.mxu0 0.0
        %812 = vmatpush.msra.mxu0 0.0
        %813 = vmatpush.msra.mxu0 0.0
        %814 = vmatpush.msra.mxu0 0.0
        %815 = vmatpush.msra.mxu0 0.0
        %816 = vmatpush.msra.mxu0 0.0
        %817 = vmatpush.msra.mxu0 0.0
        %818 = vmatpush.msra.mxu0 0.0
        %819 = vmatpush.msra.mxu0 0.0
        %820 = vmatpush.msra.mxu0 0.0
        %821 = vmatpush.msra.mxu0 0.0
        %822 = vmatpush.msra.mxu0 0.0
        %823 = vmatpush.msra.mxu0 0.0
        %824 = vmatpush.msra.mxu0 0.0
        %825 = vmatpush.msra.mxu0 0.0
        %826 = vmatpush.msra.mxu0 %v486
        %827 = vmatmul.f32.gmra.mxu0 %v809
        %v828 = vpop.f32.mrf.mxu0
        %v829 = vadd.f32 0.0, %v828
        %830 = vdwg.mxu0
        %v832 = vsel %vm761, %v745, 0
        %834 = vmatpush.msra.mxu0 0.0
        %835 = vmatpush.msra.mxu0 0.0
        %836 = vmatpush.msra.mxu0 0.0
        %837 = vmatpush.msra.mxu0 0.0
        %838 = vmatpush.msra.mxu0 0.0
        %839 = vmatpush.msra.mxu0 0.0
        %840 = vmatpush.msra.mxu0 0.0
        %841 = vmatpush.msra.mxu0 0.0
        %842 = vmatpush.msra.mxu0 0.0
        %843 = vmatpush.msra.mxu0 0.0
        %844 = vmatpush.msra.mxu0 0.0
        %845 = vmatpush.msra.mxu0 0.0
        %846 = vmatpush.msra.mxu0 0.0
        %847 = vmatpush.msra.mxu0 0.0
        %848 = vmatpush.msra.mxu0 0.0
        %849 = vmatpush.msra.mxu0 %v489
        %850 = vmatmul.f32.gmra.mxu0 %v832
        %v851 = vpop.f32.mrf.mxu0
        %v852 = vadd.f32 0.0, %v851
        %853 = vdwg.mxu0
        %vm854 = vcmask 130048
        %v855 = vsel %vm854, %v783, -inf
        %856 = vmax.xlane.f32.xlu0 %v855
        %v857 = vpop.xlane.xlu0 %856
        %v858 = vsel %vm854, %v806, -inf
        %859 = vmax.xlane.f32.xlu0 %v858
        %v860 = vpop.xlane.xlu0 %859
        %v861 = vsel %vm854, %v829, -inf
        %862 = vmax.xlane.f32.xlu0 %v861
        %v863 = vpop.xlane.xlu0 %862
        %v864 = vsel %vm854, %v852, -inf
        %865 = vmax.xlane.f32.xlu0 %v864
        %v866 = vpop.xlane.xlu0 %865
        %v867 = vsub.f32 %v783, %v857
        %v868 = vsub.f32 %v806, %v860
        %v869 = vsub.f32 %v829, %v863
        %v870 = vsub.f32 %v852, %v866
        %v871 = vmul.f32 %v867, 1.442695
        %v872 = vpow.pop %v871
        %v873 = vmul.f32 %v868, 1.442695
        %v874 = vpow.pop %v873
        %v875 = vmul.f32 %v869, 1.442695
        %v876 = vpow.pop %v875
        %v877 = vmul.f32 %v870, 1.442695
        %v878 = vpow.pop %v877
        %v879 = vsel %vm854, %v872, 0.0
        %880 = vadd.xlane.f32.xlu0 %v879
        %v881 = vpop.xlane.xlu0 %880
        %v882 = vsel %vm854, %v874, 0.0
        %883 = vadd.xlane.f32.xlu0 %v882
        %v884 = vpop.xlane.xlu0 %883
        %v885 = vsel %vm854, %v876, 0.0
        %886 = vadd.xlane.f32.xlu0 %v885
        %v887 = vpop.xlane.xlu0 %886
        %v888 = vsel %vm854, %v878, 0.0
        %889 = vadd.xlane.f32.xlu0 %v888
        %v890 = vpop.xlane.xlu0 %889
        %v891 = vrcp.pop %v881
        %v892 = vmul.f32 %v881, %v891
        %v893 = vsub.f32 1.0, %v892
        %v894 = vmul.f32 %v891, %v893
        %v895 = vadd.f32 %v891, %v894
        %vm896 = vweird.f32 %v881
        %vm897 = vweird.f32 %v891
        %vm898 = vmor %vm896, %vm897
        %v899 = vsel %vm898, %v891, %v895
        %v900 = vand.u32 2147483647, %v881
        %vm901 = vcmp.eq.f32.partialorder %v900, 8.507059e+37
        %v902 = vand.u32 %v881, 2147483648
        %v903 = vor.u32 1.1754944e-38, %v902
        %v904 = vsel %vm901, %v903, %v899
        %v905 = vrcp.pop %v884
        %v906 = vmul.f32 %v884, %v905
        %v907 = vsub.f32 1.0, %v906
        %v908 = vmul.f32 %v905, %v907
        %v909 = vadd.f32 %v905, %v908
        %vm910 = vweird.f32 %v884
        %vm911 = vweird.f32 %v905
        %vm912 = vmor %vm910, %vm911
        %v913 = vsel %vm912, %v905, %v909
        %v914 = vand.u32 2147483647, %v884
        %vm915 = vcmp.eq.f32.partialorder %v914, 8.507059e+37
        %v916 = vand.u32 %v884, 2147483648
        %v917 = vor.u32 1.1754944e-38, %v916
        %v918 = vsel %vm915, %v917, %v913
        %v919 = vrcp.pop %v887
        %v920 = vmul.f32 %v887, %v919
        %v921 = vsub.f32 1.0, %v920
        %v922 = vmul.f32 %v919, %v921
        %v923 = vadd.f32 %v919, %v922
        %vm924 = vweird.f32 %v887
        %vm925 = vweird.f32 %v919
        %vm926 = vmor %vm924, %vm925
        %v927 = vsel %vm926, %v919, %v923
        %v928 = vand.u32 2147483647, %v887
        %vm929 = vcmp.eq.f32.partialorder %v928, 8.507059e+37
        %v930 = vand.u32 %v887, 2147483648
        %v931 = vor.u32 1.1754944e-38, %v930
        %v932 = vsel %vm929, %v931, %v927
        %v933 = vrcp.pop %v890
        %v934 = vmul.f32 %v890, %v933
        %v935 = vsub.f32 1.0, %v934
        %v936 = vmul.f32 %v933, %v935
        %v937 = vadd.f32 %v933, %v936
        %vm938 = vweird.f32 %v890
        %vm939 = vweird.f32 %v933
        %vm940 = vmor %vm938, %vm939
        %v941 = vsel %vm940, %v933, %v937
        %v942 = vand.u32 2147483647, %v890
        %vm943 = vcmp.eq.f32.partialorder %v942, 8.507059e+37
        %v944 = vand.u32 %v890, 2147483648
        %v945 = vor.u32 1.1754944e-38, %v944
        %v946 = vsel %vm943, %v945, %v941
        %v947 = vmul.f32 %v872, %v904
        %v948 = vmul.f32 %v874, %v918
        %v949 = vmul.f32 %v876, %v932
        %v950 = vmul.f32 %v878, %v946
        %v952 = vsel %vm854, %v549, 0
        %v955 = vsel %vm854, %v947, 0
        %957 = vmatpush.xpose.msra.mxu0 0.0
        %958 = vmatpush.xpose.msra.mxu0 0.0
        %959 = vmatpush.xpose.msra.mxu0 0.0
        %960 = vmatpush.xpose.msra.mxu0 0.0
        %961 = vmatpush.xpose.msra.mxu0 0.0
        %962 = vmatpush.xpose.msra.mxu0 0.0
        %963 = vmatpush.xpose.msra.mxu0 0.0
        %964 = vmatpush.xpose.msra.mxu0 0.0
        %965 = vmatpush.xpose.msra.mxu0 0.0
        %966 = vmatpush.xpose.msra.mxu0 0.0
        %967 = vmatpush.xpose.msra.mxu0 0.0
        %968 = vmatpush.xpose.msra.mxu0 0.0
        %969 = vmatpush.xpose.msra.mxu0 0.0
        %970 = vmatpush.xpose.msra.mxu0 0.0
        %971 = vmatpush.xpose.msra.mxu0 0.0
        %972 = vmatpush.xpose.msra.mxu0 %v955
        %973 = vmatmul.f32.gmra.mxu0 %v952
        %v974 = vpop.f32.mrf.mxu0
        %v975 = vadd.f32 0.0, %v974
        %976 = vdwg.mxu0
        %v978 = vsel %vm854, %v552, 0
        %v981 = vsel %vm854, %v948, 0
        %983 = vmatpush.xpose.msra.mxu0 0.0
        %984 = vmatpush.xpose.msra.mxu0 0.0
        %985 = vmatpush.xpose.msra.mxu0 0.0
        %986 = vmatpush.xpose.msra.mxu0 0.0
        %987 = vmatpush.xpose.msra.mxu0 0.0
        %988 = vmatpush.xpose.msra.mxu0 0.0
        %989 = vmatpush.xpose.msra.mxu0 0.0
        %990 = vmatpush.xpose.msra.mxu0 0.0
        %991 = vmatpush.xpose.msra.mxu0 0.0
        %992 = vmatpush.xpose.msra.mxu0 0.0
        %993 = vmatpush.xpose.msra.mxu0 0.0
        %994 = vmatpush.xpose.msra.mxu0 0.0
        %995 = vmatpush.xpose.msra.mxu0 0.0
        %996 = vmatpush.xpose.msra.mxu0 0.0
        %997 = vmatpush.xpose.msra.mxu0 0.0
        %998 = vmatpush.xpose.msra.mxu0 %v981
        %999 = vmatmul.f32.gmra.mxu0 %v978
        %v1000 = vpop.f32.mrf.mxu0
        %v1001 = vadd.f32 0.0, %v1000
        %1002 = vdwg.mxu0
        %v1004 = vsel %vm854, %v555, 0
        %v1007 = vsel %vm854, %v949, 0
        %1009 = vmatpush.xpose.msra.mxu0 0.0
        %1010 = vmatpush.xpose.msra.mxu0 0.0
        %1011 = vmatpush.xpose.msra.mxu0 0.0
        %1012 = vmatpush.xpose.msra.mxu0 0.0
        %1013 = vmatpush.xpose.msra.mxu0 0.0
        %1014 = vmatpush.xpose.msra.mxu0 0.0
        %1015 = vmatpush.xpose.msra.mxu0 0.0
        %1016 = vmatpush.xpose.msra.mxu0 0.0
        %1017 = vmatpush.xpose.msra.mxu0 0.0
        %1018 = vmatpush.xpose.msra.mxu0 0.0
        %1019 = vmatpush.xpose.msra.mxu0 0.0
        %1020 = vmatpush.xpose.msra.mxu0 0.0
        %1021 = vmatpush.xpose.msra.mxu0 0.0
        %1022 = vmatpush.xpose.msra.mxu0 0.0
        %1023 = vmatpush.xpose.msra.mxu0 0.0
        %1024 = vmatpush.xpose.msra.mxu0 %v1007
        %1025 = vmatmul.f32.gmra.mxu0 %v1004
        %v1026 = vpop.f32.mrf.mxu0
        %v1027 = vadd.f32 0.0, %v1026
        %1028 = vdwg.mxu0
        %v1030 = vsel %vm854, %v558, 0
        %v1033 = vsel %vm854, %v950, 0
        %1035 = vmatpush.xpose.msra.mxu0 0.0
        %1036 = vmatpush.xpose.msra.mxu0 0.0
        %1037 = vmatpush.xpose.msra.mxu0 0.0
        %1038 = vmatpush.xpose.msra.mxu0 0.0
        %1039 = vmatpush.xpose.msra.mxu0 0.0
        %1040 = vmatpush.xpose.msra.mxu0 0.0
        %1041 = vmatpush.xpose.msra.mxu0 0.0
        %1042 = vmatpush.xpose.msra.mxu0 0.0
        %1043 = vmatpush.xpose.msra.mxu0 0.0
        %1044 = vmatpush.xpose.msra.mxu0 0.0
        %1045 = vmatpush.xpose.msra.mxu0 0.0
        %1046 = vmatpush.xpose.msra.mxu0 0.0
        %1047 = vmatpush.xpose.msra.mxu0 0.0
        %1048 = vmatpush.xpose.msra.mxu0 0.0
        %1049 = vmatpush.xpose.msra.mxu0 0.0
        %1050 = vmatpush.xpose.msra.mxu0 %v1033
        %1051 = vmatmul.f32.gmra.mxu0 %v1030
        %v1052 = vpop.f32.mrf.mxu0
        %v1053 = vadd.f32 0.0, %v1052
        %1054 = vdwg.mxu0
        %1055 = vxpose.xlu0.b32.start [1/16] %v975, 128
        %1056 = vxpose.xlu0.b32.cont [2/16] %v1001, 128
        %1057 = vxpose.xlu0.b32.cont [3/16] %v1027, 128
        %1058 = vxpose.xlu0.b32.cont [4/16] %v1053, 128
        %1059 = vxpose.xlu0.b32.cont [5/16] 0.0, 128
        %1060 = vxpose.xlu0.b32.cont [6/16] 0.0, 128
        %1061 = vxpose.xlu0.b32.cont [7/16] 0.0, 128
        %1062 = vxpose.xlu0.b32.cont [8/16] 0.0, 128
        %1063 = vxpose.xlu0.b32.cont [9/16] 0.0, 128
        %1064 = vxpose.xlu0.b32.cont [10/16] 0.0, 128
        %1065 = vxpose.xlu0.b32.cont [11/16] 0.0, 128
        %1066 = vxpose.xlu0.b32.cont [12/16] 0.0, 128
        %1067 = vxpose.xlu0.b32.cont [13/16] 0.0, 128
        %1068 = vxpose.xlu0.b32.cont [14/16] 0.0, 128
        %1069 = vxpose.xlu0.b32.cont [15/16] 0.0, 128
        %1070 = vxpose.xlu0.b32.end [16/16] 0.0, 128
        %v1071 = vpop.trf.xlu0
        %v1072 = vpop.trf.xlu0
        %v1073 = vpop.trf.xlu0
        %v1074 = vpop.trf.xlu0
        %v1075 = vpop.trf.xlu0
        %v1076 = vpop.trf.xlu0
        %v1077 = vpop.trf.xlu0
        %v1078 = vpop.trf.xlu0
        %v1079 = vpop.trf.xlu0
        %v1080 = vpop.trf.xlu0
        %v1081 = vpop.trf.xlu0
        %v1082 = vpop.trf.xlu0
        %v1083 = vpop.trf.xlu0
        %v1084 = vpop.trf.xlu0
        %v1085 = vpop.trf.xlu0
        %v1086 = vpop.trf.xlu0
        %v1087 = vld [vmem:[#allocation8] sm:$0xff]
        %v1088 = vld [vmem:[#allocation8 + $0x8] sm:$0xff]
        %v1089 = vld [vmem:[#allocation8 + $0x10] sm:$0xff]
        %v1090 = vld [vmem:[#allocation8 + $0x18] sm:$0xff]
        %v1091 = vld [vmem:[%s8] sm:$0x1]
        %v1093 = vperm.slane %v1091, 0
        %v1096 = vsel %vm443, %v1071, 0
        %v1099 = vsel %vm443, %v1087, 0
        %v1102 = vsel %vm443, %v1088, 0
        %v1105 = vsel %vm443, %v1089, 0
        %v1108 = vsel %vm443, %v1090, 0
        %1110 = vmatpush.xpose.msra.mxu0 0.0
        %1111 = vmatpush.xpose.msra.mxu0 0.0
        %1112 = vmatpush.xpose.msra.mxu0 0.0
        %1113 = vmatpush.xpose.msra.mxu0 0.0
        %1114 = vmatpush.xpose.msra.mxu0 0.0
        %1115 = vmatpush.xpose.msra.mxu0 0.0
        %1116 = vmatpush.xpose.msra.mxu0 0.0
        %1117 = vmatpush.xpose.msra.mxu0 0.0
        %1118 = vmatpush.xpose.msra.mxu0 0.0
        %1119 = vmatpush.xpose.msra.mxu0 0.0
        %1120 = vmatpush.xpose.msra.mxu0 0.0
        %1121 = vmatpush.xpose.msra.mxu0 0.0
        %1122 = vmatpush.xpose.msra.mxu0 %v1108
        %1123 = vmatpush.xpose.msra.mxu0 %v1105
        %1124 = vmatpush.xpose.msra.mxu0 %v1102
        %1125 = vmatpush.xpose.msra.mxu0 %v1099
        %1126 = vmatmul.f32.gmra.mxu0 %v1096
        %v1127 = vpop.f32.mrf.mxu0
        %v1128 = vadd.f32 %v1093, %v1127
        %1129 = vdwg.mxu0
        %1130 = vst.msk [vmem:[%s431] sm:$0xff] %vm443, %v1128
        %s1131 = sand.u32 %s251, 1
        %s1132 = scalar_lea.sflag [#allocation4], %s1131
        %s1133 = sand.u32 %s251, 1
        %s1134 = smul.addr %s1133, 8
        %s1135 = scalar_lea.vmem [#allocation10], %s1134
        // Predicated region
        $region73: #{tpu_custom_call.1} parent=55 // pred_check
          %p1136 = pneg %p261
        $region74: #{tpu_custom_call.1} parent=55 // pred_check_branch
          %1138 = sbr.rel (%p1136) target = $region76
        $region75: #{tpu_custom_call.1} parent=55 // pred_region
          %1140 = vsyncadd %s1132, 0
          %s1141 = sadd.s32 %s33, %s32
          %s1142 = smul.addr %s1141, 8
          %s1143 = scalar_lea.hbm %s9, %s1142
          %s1145 = sshll.u32 %s1135, 4
          %s1146 = int_to_ptr.vmem [resolvable:$true] %s1145
          %s1147 = sshll.u32 %s1143, 4
          %s1148 = int_to_ptr.hbm [resolvable:$true] %s1147
          %1150 = dma.vmem_to_hbm [thread:$0]  %s1146, 128, %s1148, %s1132
        $region76: #{tpu_custom_call.1} parent=55 // pred_fallthru
          _
      $region56: #{tpu_custom_call.1} parent=5 // pred_fallthru
        _
      %p1151 = scmp.le.s32.totalorder 2, %s23
      // Predicated region
      $region77: #{tpu_custom_call.1} parent=5 // pred_check
        %p1152 = pneg %p1151
      $region78: #{tpu_custom_call.1} parent=5 // pred_check_branch
        %1154 = sbr.rel (%p1152) target = $region80
      $region79: #{tpu_custom_call.1} parent=5 // pred_region
        %s1155 = ssub.s32 %s23, 2
        // Predicated region
        $region81: #{tpu_custom_call.1} parent=79 // pred_check
          %p1156 = pneg %p267
        $region82: #{tpu_custom_call.1} parent=79 // pred_check_branch
          %1158 = sbr.rel (%p1156) target = $region84
        $region83: #{tpu_custom_call.1} parent=79 // pred_region
          %s1159 = sand.u32 %s252, 1
          %s1160 = scalar_lea.sflag [#allocation4], %s1159
          %s1161 = sand.u32 %s252, 1
          %s1162 = smul.addr %s1161, 8
          %s1163 = scalar_lea.vmem [#allocation10], %s1162
          %1165 = dma.done %s1160, 128
        $region84: #{tpu_custom_call.1} parent=79 // pred_fallthru
          _
      $region80: #{tpu_custom_call.1} parent=5 // pred_fallthru
        _
    $region6: #{tpu_custom_call.1} parent=1 // loop_footer
      %s27 = sadd.s32 1, %s23
    $region7: #{tpu_custom_call.1} parent=1 // loop_footer_branch
      %22 = sbr.rel target = $region3
    $region8: #{tpu_custom_call.1} parent=1 // loop_exit
      _
    %1166 = vsyncpa [#allocation3], 1
    %s1167 = scalar_lea.sflag [#allocation3], 1
    %1168 = vsyncpa %s1167, 1
    %1169 = vsyncpa [#allocation6], 1
    %1170 = vsyncpa [#allocation9], 1
    %1171 = vsyncpa [#allocation4], 1
    %s1172 = scalar_lea.sflag [#allocation4], 1
    %1173 = vsyncpa %s1172, 1

</llo_original>
